<compile_context>
chip_gen: v7x
topology: tpu7x:2x2x1
jax: 0.10.0
libtpu: 0.0.40
codegen_flags: <defaults>
</compile_context>

<pallas_src>
import math

import jax
import jax.numpy as jnp
from jax.experimental import pallas as pl
from jax.experimental.pallas import tpu as pltpu

_HALF_PI = math.pi / 2.0


def _round_up(n, m):
    return ((n + m - 1) // m) * m


def _tensorcores_per_chip():
    # v7x has 2 TensorCores per chip; v5e/v6e have 1.  Grid splitting for
    # megacore sharding is only worth it on multi-TC chips.
    try:
        kind = jax.devices()[0].device_kind.lower()
    except Exception:
        return 1
    return 2 if "v7" in kind else 1


def _make_kernel(out_f, out_p):
    inv_n = 1.0 / float(out_f)

    def kernel(x_ref, wproj_ref, bproj_ref, wo_ref, gamma_ref, beta_ref, o_ref):
        # Fused x-projection: [tb, in] @ [in, out_p + f_p], f32 accumulation.
        #   lanes [0, out_p)        -> linear_out  (b1 + bo folded into bias)
        #   lanes [out_p, out_p+F)  -> s            (= (x@Wf^T + bf) * fs, folded)
        #   lanes [out_p+F, ..+2F)  -> s + pi/2     (so sin() of it equals cos(s))
        proj = (
            jnp.dot(x_ref[...], wproj_ref[...], preferred_element_type=jnp.float32)
            + bproj_ref[...]
        )
        linear_out = proj[:, :out_p]          # 128-lane-aligned slice (free)
        phases = proj[:, out_p:]              # [tb, f_p]

        # One transcendental pass gives both sin(s) and cos(s) lanes.
        feats = jnp.sin(phases)

        # Single MXU dot for the whole Fourier branch.
        fourier_out = jnp.dot(
            feats.astype(wo_ref.dtype), wo_ref[...],
            preferred_element_type=jnp.float32,
        )

        # Padded lanes of `combined` are exactly zero (zero weight columns /
        # biases), so stats over the real out_f lanes need no mask.
        combined = linear_out + fourier_out
        mean = jnp.sum(combined, axis=-1, keepdims=True) * inv_n
        var = jnp.sum(combined * combined, axis=-1, keepdims=True) * inv_n - mean * mean
        normed = (combined - mean) * jax.lax.rsqrt(var + 1e-5)
        # Padded gamma/beta lanes are zero -> padded output lanes are zero.
        o_ref[...] = (normed * gamma_ref[...] + beta_ref[...]).astype(o_ref.dtype)

    return kernel


def fourier_layer(x, params, *, tb=1024, matmul_dtype=jnp.bfloat16,
                  out_dtype=jnp.float32, trim_output=True):
    """x: [B, in_features] float32.  params: dict of weights (PyTorch shapes)."""
    B, in_f = x.shape
    out_f = params["w1"].shape[0]
    F = params["wf"].shape[0]

    out_p = max(_round_up(out_f, 128), 128)       # lane-dense output section
    f_p = max(_round_up(2 * F, 128), 128)         # sin+cos phase section
    f32 = jnp.float32

    # ---- wrapper-side weight folding (done once per param set) -------------
    fs = params["frequency_scale"].astype(f32)
    w1t = params["w1"].T.astype(f32)                       # [in, out]
    wft_scaled = params["wf"].T.astype(f32) * fs[None, :]  # [in, F], fs folded

    wproj = jnp.zeros((in_f, out_p + f_p), f32)
    wproj = wproj.at[:, :out_f].set(w1t)
    wproj = wproj.at[:, out_p:out_p + F].set(wft_scaled)              # sin phases
    wproj = wproj.at[:, out_p + F:out_p + 2 * F].set(wft_scaled)      # cos phases

    bproj = jnp.zeros((1, out_p + f_p), f32)
    bproj = bproj.at[0, :out_f].set(params["b1"] + params["bo"])      # b1+bo folded
    bproj = bproj.at[0, out_p:out_p + F].set(params["bf"] * fs)
    bproj = bproj.at[0, out_p + F:out_p + 2 * F].set(params["bf"] * fs + _HALF_PI)

    wot = params["wo"].T.astype(f32)                       # [2F, out]
    wo_full = jnp.zeros((f_p, out_p), f32)
    wo_full = wo_full.at[:2 * F, :out_f].set(wot)          # rows: sin then cos

    gamma = jnp.zeros((1, out_p), f32).at[0, :out_f].set(params["ln_w"])
    beta = jnp.zeros((1, out_p), f32).at[0, :out_f].set(params["ln_b"])

    # MXU operands in bf16 by default (full-rate MXU path, halves x HBM read /
    # VMEM feed); accumulation, biases, sin and LayerNorm stay f32.
    x_mm = x.astype(matmul_dtype)
    wproj = wproj.astype(matmul_dtype)
    wo_full = wo_full.astype(matmul_dtype)

    # ---- batch tiling: no padding, ragged last block handled by Pallas -----
    tb_req = max(8, min(_round_up(tb, 8), _round_up(B, 8)))
    steps = pl.cdiv(B, tb_req)
    if _tensorcores_per_chip() >= 2 and steps == 1 and B >= 16:
        steps = 2                      # give both v7x TensorCores work
    tb = max(8, _round_up(pl.cdiv(B, steps), 8))   # rebalance tile to step count
    grid = (pl.cdiv(B, tb),)

    const = lambda shape: pl.BlockSpec(shape, lambda i: (0, 0))

    out = pl.pallas_call(
        _make_kernel(out_f, out_p),
        out_shape=jax.ShapeDtypeStruct((B, out_p), out_dtype),
        grid_spec=pltpu.PrefetchScalarGridSpec(
            num_scalar_prefetch=0,
            grid=grid,
            in_specs=[
                pl.BlockSpec((tb, in_f), lambda i: (i, 0)),   # x tile
                const((in_f, out_p + f_p)),                   # fused proj weight
                const((1, out_p + f_p)),                      # fused proj bias (f32)
                const((f_p, out_p)),                          # fourier_out weight
                const((1, out_p)),                            # gamma (f32)
                const((1, out_p)),                            # beta  (f32)
            ],
            out_specs=pl.BlockSpec((tb, out_p), lambda i: (i, 0)),
        ),
        compiler_params=pltpu.CompilerParams(
            dimension_semantics=("parallel",),
        ),
    )(x_mm, wproj, bproj, wo_full, gamma, beta)

    # Lane trim only (no row trim needed since out_shape already has B rows).
    # Consumers that tolerate the padded [B, out_p] slab (only first out_f
    # lanes valid) can pass trim_output=False to skip this extra copy.
    return out[:, :out_f] if trim_output else out


def init_params(key, in_features, out_features, num_frequencies):
    """Deterministic init matching FourierLayer._reset_parameters."""
    def xavier_uniform(k, shape, gain):
        fan_out, fan_in = shape  # PyTorch Linear weight is [out, in]
        bound = gain * math.sqrt(6.0 / (fan_in + fan_out))
        return jax.random.uniform(k, shape, jnp.float32, -bound, bound)

    k1, k2, k3 = jax.random.split(key, 3)
    return {
        "w1": xavier_uniform(k1, (out_features, in_features), 0.5),
        "b1": jnp.zeros((out_features,), jnp.float32),
        "wf": xavier_uniform(k2, (num_frequencies, in_features), 0.5),
        "bf": jnp.zeros((num_frequencies,), jnp.float32),
        "wo": xavier_uniform(k3, (out_features, 2 * num_frequencies), 0.5),
        "bo": jnp.zeros((out_features,), jnp.float32),
        "frequency_scale": jnp.ones((num_frequencies,), jnp.float32) * 0.5,
        "ln_w": jnp.ones((out_features,), jnp.float32),
        "ln_b": jnp.zeros((out_features,), jnp.float32),
    }


def fourier_layer_ref(x, p):
    """Pure-JAX reference matching the PyTorch forward exactly."""
    linear_out = x @ p["w1"].T + p["b1"]
    freq_projection = x @ p["wf"].T + p["bf"]
    scaled = freq_projection * p["frequency_scale"][None, :]
    ff = jnp.concatenate([jnp.sin(scaled), jnp.cos(scaled)], axis=-1)
    fourier_out = ff @ p["wo"].T + p["bo"]
    combined = linear_out + fourier_out
    mean = jnp.mean(combined, axis=-1, keepdims=True)
    var = jnp.mean((combined - mean) ** 2, axis=-1, keepdims=True)
    normed = (combined - mean) / jnp.sqrt(var + 1e-5)
    return normed * p["ln_w"] + p["ln_b"]


if __name__ == "__main__":
    key = jax.random.PRNGKey(0)
    kx, kx2, kp = jax.random.split(key, 3)

    in_features, out_features, num_frequencies = 32, 32, 8
    params = init_params(kp, in_features, out_features, num_frequencies)

    # Check 1: small batch, single tile, f32 MXU path -> tight tolerance.
    batch = 8
    x = jax.random.normal(kx, (batch, in_features), jnp.float32)
    out_f32 = jax.block_until_ready(
        fourier_layer(x, params, matmul_dtype=jnp.float32))
    ref = fourier_layer_ref(x, params)
    assert out_f32.shape == (batch, out_features)
    assert jnp.allclose(out_f32, ref, atol=1e-4, rtol=1e-4), float(
        jnp.max(jnp.abs(out_f32 - ref)))

    # Check 2: default bf16 MXU operands, batch not a multiple of 8 ->
    # exercises the ragged last block (masked output writes, no padding pass).
    batch2 = 20
    x2 = jax.random.normal(kx2, (batch2, in_features), jnp.float32)
    out_bf = jax.block_until_ready(fourier_layer(x2, params))
    ref2 = fourier_layer_ref(x2, params)
    assert out_bf.shape == (batch2, out_features)
    assert jnp.allclose(out_bf, ref2, atol=5e-2, rtol=5e-2), float(
        jnp.max(jnp.abs(out_bf - ref2)))

    # Check 3: force a multi-step grid (tb=8 -> 3 steps, last one ragged),
    # f32 path for a tight-tolerance check of the pipeline masking.
    out_multi = jax.block_until_ready(
        fourier_layer(x2, params, tb=8, matmul_dtype=jnp.float32))
    assert out_multi.shape == (batch2, out_features)
    assert jnp.allclose(out_multi, ref2, atol=1e-4, rtol=1e-4), float(
        jnp.max(jnp.abs(out_multi - ref2)))

    print("KERNEL_OK")
</pallas_src>

<mosaic_0001>
module attributes {stable_mosaic.version = 11 : i64} {
  func.func @kernel(%arg0: i32, %arg1: memref<8x32xf32, #tpu.memory_space<vmem>>, %arg2: memref<32x256xf32, #tpu.memory_space<vmem>>, %arg3: memref<1x256xf32, #tpu.memory_space<vmem>>, %arg4: memref<128x128xf32, #tpu.memory_space<vmem>>, %arg5: memref<1x128xf32, #tpu.memory_space<vmem>>, %arg6: memref<1x128xf32, #tpu.memory_space<vmem>>, %arg7: memref<8x128xf32, #tpu.memory_space<vmem>>) attributes {dimension_semantics = [#tpu.dimension_semantics<parallel>], iteration_bounds = array<i64: 1>, scalar_prefetch = 0 : i64, scratch_operands = 0 : i64, tpu.core_type = #tpu.core_type<tc>, window_params = [{transform_indices = @transform_0, window_bounds = array<i64: 8, 32>}, {pipeline_mode = #tpu.pipeline_mode<synchronous>, transform_indices = @transform_1, window_bounds = array<i64: 32, 256>}, {pipeline_mode = #tpu.pipeline_mode<synchronous>, transform_indices = @transform_2, window_bounds = array<i64: 1, 256>}, {pipeline_mode = #tpu.pipeline_mode<synchronous>, transform_indices = @transform_3, window_bounds = array<i64: 128, 128>}, {pipeline_mode = #tpu.pipeline_mode<synchronous>, transform_indices = @transform_4, window_bounds = array<i64: 1, 128>}, {pipeline_mode = #tpu.pipeline_mode<synchronous>, transform_indices = @transform_5, window_bounds = array<i64: 1, 128>}, {transform_indices = @transform_6, window_bounds = array<i64: 8, 128>}]} {
    %c0 = arith.constant 0 : index
    %c0_0 = arith.constant 0 : index
    %0 = vector.load %arg1[%c0, %c0_0] : memref<8x32xf32, #tpu.memory_space<vmem>>, vector<8x32xf32>
    %c0_1 = arith.constant 0 : index
    %c0_2 = arith.constant 0 : index
    %1 = vector.load %arg2[%c0_1, %c0_2] : memref<32x256xf32, #tpu.memory_space<vmem>>, vector<32x256xf32>
    %cst = arith.constant dense<0.000000e+00> : vector<8x256xf32>
    %2 = tpu.matmul %0, %1, %cst {dimension_numbers = #tpu.dot_dimension_numbers<[1], [0], [0], [1], [0, 0, 1, 1], [], []>} : vector<8x32xf32>, vector<32x256xf32>, vector<8x256xf32> -> vector<8x256xf32>
    %c0_3 = arith.constant 0 : index
    %c0_4 = arith.constant 0 : index
    %3 = vector.load %arg3[%c0_3, %c0_4] : memref<1x256xf32, #tpu.memory_space<vmem>>, vector<1x256xf32>
    %4 = vector.broadcast %3 : vector<1x256xf32> to vector<8x256xf32>
    %5 = arith.addf %2, %4 : vector<8x256xf32>
    %6 = vector.extract_strided_slice %5 {offsets = [0, 0], sizes = [8, 128], strides = [1, 1]} : vector<8x256xf32> to vector<8x128xf32>
    %7 = vector.extract_strided_slice %5 {offsets = [0, 128], sizes = [8, 128], strides = [1, 1]} : vector<8x256xf32> to vector<8x128xf32>
    %8 = math.sin %7 : vector<8x128xf32>
    %c0_5 = arith.constant 0 : index
    %c0_6 = arith.constant 0 : index
    %9 = vector.load %arg4[%c0_5, %c0_6] : memref<128x128xf32, #tpu.memory_space<vmem>>, vector<128x128xf32>
    %cst_7 = arith.constant dense<0.000000e+00> : vector<8x128xf32>
    %10 = tpu.matmul %8, %9, %cst_7 {dimension_numbers = #tpu.dot_dimension_numbers<[1], [0], [0], [1], [0, 0, 1, 1], [], []>} : vector<8x128xf32>, vector<128x128xf32>, vector<8x128xf32> -> vector<8x128xf32>
    %11 = arith.addf %6, %10 : vector<8x128xf32>
    %cst_8 = arith.constant dense<0.000000e+00> : vector<8xf32>
    %12 = vector.multi_reduction <add>, %11, %cst_8 [1] : vector<8x128xf32> to vector<8xf32>
    %13 = vector.shape_cast %12 : vector<8xf32> to vector<8x1xf32>
    %cst_9 = arith.constant 3.125000e-02 : f32
    %14 = vector.broadcast %cst_9 : f32 to vector<8x1xf32>
    %15 = arith.mulf %13, %14 : vector<8x1xf32>
    %16 = arith.mulf %11, %11 : vector<8x128xf32>
    %cst_10 = arith.constant dense<0.000000e+00> : vector<8xf32>
    %17 = vector.multi_reduction <add>, %16, %cst_10 [1] : vector<8x128xf32> to vector<8xf32>
    %18 = vector.shape_cast %17 : vector<8xf32> to vector<8x1xf32>
    %cst_11 = arith.constant 3.125000e-02 : f32
    %19 = vector.broadcast %cst_11 : f32 to vector<8x1xf32>
    %20 = arith.mulf %18, %19 : vector<8x1xf32>
    %21 = arith.mulf %15, %15 : vector<8x1xf32>
    %22 = arith.subf %20, %21 : vector<8x1xf32>
    %23 = vector.broadcast %15 : vector<8x1xf32> to vector<8x128xf32>
    %24 = arith.subf %11, %23 : vector<8x128xf32>
    %cst_12 = arith.constant 9.99999974E-6 : f32
    %25 = vector.broadcast %cst_12 : f32 to vector<8x1xf32>
    %26 = arith.addf %22, %25 : vector<8x1xf32>
    %27 = math.rsqrt %26 : vector<8x1xf32>
    %28 = vector.broadcast %27 : vector<8x1xf32> to vector<8x128xf32>
    %29 = arith.mulf %24, %28 : vector<8x128xf32>
    %c0_13 = arith.constant 0 : index
    %c0_14 = arith.constant 0 : index
    %30 = vector.load %arg5[%c0_13, %c0_14] : memref<1x128xf32, #tpu.memory_space<vmem>>, vector<1x128xf32>
    %31 = vector.broadcast %30 : vector<1x128xf32> to vector<8x128xf32>
    %32 = arith.mulf %29, %31 : vector<8x128xf32>
    %c0_15 = arith.constant 0 : index
    %c0_16 = arith.constant 0 : index
    %33 = vector.load %arg6[%c0_15, %c0_16] : memref<1x128xf32, #tpu.memory_space<vmem>>, vector<1x128xf32>
    %34 = vector.broadcast %33 : vector<1x128xf32> to vector<8x128xf32>
    %35 = arith.addf %32, %34 : vector<8x128xf32>
    %c0_17 = arith.constant 0 : index
    %c0_18 = arith.constant 0 : index
    %36 = vector.load %arg7[%c0_17, %c0_18] : memref<8x128xf32, #tpu.memory_space<vmem>>, vector<8x128xf32>
    tpu.vector_store %arg7[%c0_17, %c0_18], %35 {strides = array<i32>} : memref<8x128xf32, #tpu.memory_space<vmem>>, vector<8x128xf32>,
    return
  }
  func.func @transform_0(%arg0: i32) -> (i32, i32) {
    %c0_i32 = arith.constant 0 : i32
    %c0_i32_0 = arith.constant 0 : i32
    return %arg0, %c0_i32 : i32, i32
  }
  func.func @transform_1(%arg0: i32) -> (i32, i32) {
    %c0_i32 = arith.constant 0 : i32
    %c0_i32_0 = arith.constant 0 : i32
    %c0_i32_1 = arith.constant 0 : i32
    return %c0_i32, %c0_i32_0 : i32, i32
  }
  func.func @transform_2(%arg0: i32) -> (i32, i32) {
    %c0_i32 = arith.constant 0 : i32
    %c0_i32_0 = arith.constant 0 : i32
    %c0_i32_1 = arith.constant 0 : i32
    return %c0_i32, %c0_i32_0 : i32, i32
  }
  func.func @transform_3(%arg0: i32) -> (i32, i32) {
    %c0_i32 = arith.constant 0 : i32
    %c0_i32_0 = arith.constant 0 : i32
    %c0_i32_1 = arith.constant 0 : i32
    return %c0_i32, %c0_i32_0 : i32, i32
  }
  func.func @transform_4(%arg0: i32) -> (i32, i32) {
    %c0_i32 = arith.constant 0 : i32
    %c0_i32_0 = arith.constant 0 : i32
    %c0_i32_1 = arith.constant 0 : i32
    return %c0_i32, %c0_i32_0 : i32, i32
  }
  func.func @transform_5(%arg0: i32) -> (i32, i32) {
    %c0_i32 = arith.constant 0 : i32
    %c0_i32_0 = arith.constant 0 : i32
    %c0_i32_1 = arith.constant 0 : i32
    return %c0_i32, %c0_i32_0 : i32, i32
  }
  func.func @transform_6(%arg0: i32) -> (i32, i32) {
    %c0_i32 = arith.constant 0 : i32
    %c0_i32_0 = arith.constant 0 : i32
    return %arg0, %c0_i32 : i32, i32
  }
}

</mosaic_0001>

<llo_original>
// kernel: tpu_custom_call.1
$region0: #{tpu_custom_call.1}
  #allocation0 [shape = 'u32[]', space=smem, size = 0x4, offset = 0x4, fixed_abs, tag = 'smem constant byte address 0x4 - core index']
  #allocation1 [shape = 'u32[144,128]{1,0:T(1,128)}', space=vmem, size = 0x12000, scoped, tag = 'internal scratch']
  %s0 = inlined_call_operand.hbm [shape: f32[8,32], index: 0, kind: input, shape index: {}]
  %s1 = inlined_call_operand.hbm [shape: f32[32,256], index: 1, kind: input, shape index: {}]
  %s2 = inlined_call_operand.vmem [shape: f32[1,256], index: 2, kind: input, shape index: {}]
  %s3 = inlined_call_operand.hbm [shape: f32[128,128], index: 3, kind: input, shape index: {}]
  %s4 = inlined_call_operand.vmem [shape: f32[1,128], index: 4, kind: input, shape index: {}]
  %s5 = inlined_call_operand.vmem [shape: f32[1,128], index: 5, kind: input, shape index: {}]
  %s6 = inlined_call_operand.hbm [shape: f32[8,128], index: 6, kind: output, shape index: {}]
  %s7 = sld [smem:[#allocation0]]
  $region46: #{tpu_custom_call.1} parent=0
    _
  %s9 = ssub.s32 1, %s7
  %s10 = scalar_select 0, %s9, %s7
  $region1: #{tpu_custom_call.1} parent=0
    #allocation2 [shape = 'u8[4096]{0}', space=vmem, size = 0x1000, scoped, tag = 'input window, operand 0, single buffered']
    #allocation3 [shape = 's32[1]{0}', space=sflag, size = 0x4, scoped, tag = 'scoped memory for tpu_custom_call.1']
    #allocation4 [shape = 's32[1]{0}', space=sflag, size = 0x4, scoped, tag = 'scoped memory for tpu_custom_call.1']
    #allocation5 [shape = 'u8[32768]{0}', space=vmem, size = 0x8000, scoped, tag = 'input window, operand 1, single buffered']
    #allocation6 [shape = 's32[1]{0}', space=sflag, size = 0x4, scoped, tag = 'scoped memory for tpu_custom_call.1']
    #allocation7 [shape = 'u8[65536]{0}', space=vmem, size = 0x10000, scoped, tag = 'input window, operand 3, single buffered']
    #allocation8 [shape = 'u8[4096]{0}', space=vmem, size = 0x1000, scoped, tag = 'output window, operand 0, single buffered']
    %11 = vsyncpa [#allocation3], 0
    %12 = vsyncpa [#allocation6], 0
    %13 = vsyncpa [#allocation4], 0
    // Predicated region
    $region2: #{tpu_custom_call.1} parent=1 // pred_check
      _
    $region3: #{tpu_custom_call.1} parent=1 // pred_check_branch
      %15 = sbr.rel (0) target = $region5
    $region4: #{tpu_custom_call.1} parent=1 // pred_region
      %s17 = ssub.s32 128, 128
      %18 = vsyncadd [#allocation3], %s17
      %s20 = sshll.u32 [#allocation2], 4
      %s21 = int_to_ptr.vmem [resolvable:$true] %s20
      %23 = dma.hbm_to_vmem [thread:$0]  %s0, 128, %s21, [#allocation3]
    $region5: #{tpu_custom_call.1} parent=1 // pred_fallthru
      _
    // Predicated region
    $region6: #{tpu_custom_call.1} parent=1 // pred_check
      _
    $region7: #{tpu_custom_call.1} parent=1 // pred_check_branch
      %25 = sbr.rel (0) target = $region9
    $region8: #{tpu_custom_call.1} parent=1 // pred_region
      %s27 = ssub.s32 1024, 1024
      %28 = vsyncadd [#allocation6], %s27
      %s29 = sshll.u32 [#allocation5], 4
      %s30 = int_to_ptr.vmem [resolvable:$true] %s29
      %35 = dma.hbm_to_vmem [thread:$0]  %s1, 1024, %s30, [#allocation6], 256, 256, 16
    $region9: #{tpu_custom_call.1} parent=1 // pred_fallthru
      _
    // Predicated region
    $region10: #{tpu_custom_call.1} parent=1 // pred_check
      _
    $region11: #{tpu_custom_call.1} parent=1 // pred_check_branch
      %37 = sbr.rel (0) target = $region13
    $region12: #{tpu_custom_call.1} parent=1 // pred_region
      _
    $region13: #{tpu_custom_call.1} parent=1 // pred_fallthru
      _
    // Predicated region
    $region14: #{tpu_custom_call.1} parent=1 // pred_check
      _
    $region15: #{tpu_custom_call.1} parent=1 // pred_check_branch
      %39 = sbr.rel (0) target = $region17
    $region16: #{tpu_custom_call.1} parent=1 // pred_region
      %s41 = ssub.s32 2048, 2048
      %42 = vsyncadd [#allocation6], %s41
      %s43 = sshll.u32 [#allocation7], 4
      %s44 = int_to_ptr.vmem [resolvable:$true] %s43
      %49 = dma.hbm_to_vmem [thread:$0]  %s3, 2048, %s44, [#allocation6], 128, 128, 8
    $region17: #{tpu_custom_call.1} parent=1 // pred_fallthru
      _
    // Predicated region
    $region18: #{tpu_custom_call.1} parent=1 // pred_check
      _
    $region19: #{tpu_custom_call.1} parent=1 // pred_check_branch
      %51 = sbr.rel (0) target = $region21
    $region20: #{tpu_custom_call.1} parent=1 // pred_region
      _
    $region21: #{tpu_custom_call.1} parent=1 // pred_fallthru
      _
    // Predicated region
    $region22: #{tpu_custom_call.1} parent=1 // pred_check
      _
    $region23: #{tpu_custom_call.1} parent=1 // pred_check_branch
      %53 = sbr.rel (0) target = $region25
    $region24: #{tpu_custom_call.1} parent=1 // pred_region
      _
    $region25: #{tpu_custom_call.1} parent=1 // pred_fallthru
      _
    // Predicated region
    $region26: #{tpu_custom_call.1} parent=1 // pred_check
      _
    $region27: #{tpu_custom_call.1} parent=1 // pred_check_branch
      %55 = sbr.rel (0) target = $region29
    $region28: #{tpu_custom_call.1} parent=1 // pred_region
      %56 = dma.done [#allocation3], 128
    $region29: #{tpu_custom_call.1} parent=1 // pred_fallthru
      _
    // Predicated region
    $region30: #{tpu_custom_call.1} parent=1 // pred_check
      _
    $region31: #{tpu_custom_call.1} parent=1 // pred_check_branch
      %58 = sbr.rel (0) target = $region33
    $region32: #{tpu_custom_call.1} parent=1 // pred_region
      %59 = dma.done [#allocation6], 1024
    $region33: #{tpu_custom_call.1} parent=1 // pred_fallthru
      _
    // Predicated region
    $region34: #{tpu_custom_call.1} parent=1 // pred_check
      _
    $region35: #{tpu_custom_call.1} parent=1 // pred_check_branch
      %61 = sbr.rel (0) target = $region37
    $region36: #{tpu_custom_call.1} parent=1 // pred_region
      %62 = dma.done [#allocation6], 2048
    $region37: #{tpu_custom_call.1} parent=1 // pred_fallthru
      _
    %v63 = vld [vmem:[#allocation2] sm:$0xff]
    %v64 = vld [vmem:[#allocation5] sm:$0xff]
    %v65 = vld [vmem:[#allocation5 + $0x8] sm:$0xff]
    %v66 = vld [vmem:[#allocation5 + $0x10] sm:$0xff]
    %v67 = vld [vmem:[#allocation5 + $0x18] sm:$0xff]
    %v68 = vld [vmem:[#allocation5 + $0x20] sm:$0xff]
    %v69 = vld [vmem:[#allocation5 + $0x28] sm:$0xff]
    %v70 = vld [vmem:[#allocation5 + $0x30] sm:$0xff]
    %v71 = vld [vmem:[#allocation5 + $0x38] sm:$0xff]
    %v72 = vld [vmem:[%s2] sm:$0x3]
    %v74 = vlaneseq
    %v75 = vshrl.u32 %v74, 7
    %v76 = vsub.s32 0, %v75
    %v77 = vrot.slane %v72, %v76
    %v78 = vlaneseq
    %v79 = vshrl.u32 %v78, 7
    %v80 = vsub.s32 1, %v79
    %v81 = vrot.slane %v72, %v80
    %vm84 = vcmask 261120
    %v86 = vsel %vm84, %v63, 0
    %88 = vmatprep.subr.mxu0 %v65
    %89 = vmatpush1.msra.mxu0 %v64
    %90 = vmatprep.subr.mxu0 %v67
    %91 = vmatpush1.msra.mxu0 %v66
    %92 = vmatprep.subr.mxu0 %v69
    %93 = vmatpush1.msra.mxu0 %v68
    %94 = vmatprep.subr.mxu0 %v71
    %95 = vmatpush1.msra.mxu0 %v70
    %96 = vmatprep.subr.mxu0 0.0
    %97 = vmatpush1.msra.mxu0 0.0
    %98 = vmatprep.subr.mxu0 0.0
    %99 = vmatpush1.msra.mxu0 0.0
    %100 = vmatprep.subr.mxu0 0.0
    %101 = vmatpush1.msra.mxu0 0.0
    %102 = vmatprep.subr.mxu0 0.0
    %103 = vmatpush1.msra.mxu0 0.0
    %104 = vmatprep.subr.mxu0 0.0
    %105 = vmatpush1.msra.mxu0 0.0
    %106 = vmatprep.subr.mxu0 0.0
    %107 = vmatpush1.msra.mxu0 0.0
    %108 = vmatprep.subr.mxu0 0.0
    %109 = vmatpush1.msra.mxu0 0.0
    %110 = vmatprep.subr.mxu0 0.0
    %111 = vmatpush1.msra.mxu0 0.0
    %112 = vmatprep.subr.mxu0 0.0
    %113 = vmatpush1.msra.mxu0 0.0
    %114 = vmatprep.subr.mxu0 0.0
    %115 = vmatpush1.msra.mxu0 0.0
    %116 = vmatprep.subr.mxu0 0.0
    %117 = vmatpush1.msra.mxu0 0.0
    %118 = vmatprep.subr.mxu0 0.0
    %119 = vmatpush1.msra.mxu0 0.0
    %120 = vmatprep.subr.mxu0 0.0
    %121 = vmatpush1.msra.mxu0 0.0
    %122 = vmatprep.subr.mxu0 0.0
    %123 = vmatpush1.msra.mxu0 0.0
    %124 = vmatprep.subr.mxu0 0.0
    %125 = vmatpush1.msra.mxu0 0.0
    %126 = vmatprep.subr.mxu0 0.0
    %127 = vmatpush1.msra.mxu0 0.0
    %128 = vmatprep.subr.mxu0 0.0
    %129 = vmatpush1.msra.mxu0 0.0
    %130 = vmatprep.subr.mxu0 0.0
    %131 = vmatpush1.msra.mxu0 0.0
    %132 = vmatprep.subr.mxu0 0.0
    %133 = vmatpush1.msra.mxu0 0.0
    %134 = vmatprep.subr.mxu0 0.0
    %135 = vmatpush1.msra.mxu0 0.0
    %136 = vmatprep.subr.mxu0 0.0
    %137 = vmatpush1.msra.mxu0 0.0
    %138 = vmatprep.subr.mxu0 0.0
    %139 = vmatpush1.msra.mxu0 0.0
    %140 = vmatprep.subr.mxu0 0.0
    %141 = vmatpush1.msra.mxu0 0.0
    %142 = vmatprep.subr.mxu0 0.0
    %143 = vmatpush1.msra.mxu0 0.0
    %144 = vmatprep.subr.mxu0 0.0
    %145 = vmatpush1.msra.mxu0 0.0
    %146 = vmatprep.subr.mxu0 0.0
    %147 = vmatpush1.msra.mxu0 0.0
    %148 = vmatprep.subr.mxu0 0.0
    %149 = vmatpush1.msra.mxu0 0.0
    %150 = vmatprep.subr.mxu0 0.0
    %151 = vmatpush1.msra.mxu0 0.0
    %152 = vmatprep.mubr.f32.mxu0 0.0
    %153 = vmatmul.mubr.f32.gmra.mrb[0].mxu0 %v86
    %v154 = vpop.f32.mrb[0].mxu0
    %v155 = vadd.f32 %v77, %v154
    %v156 = vpop.f32.mrb[0].mxu0
    %v157 = vadd.f32 %v81, %v156
    %158 = vdwg.mxu0
    %v159 = vand.u32 2147483647, %v157
    %vm160 = vcmp.le.f32.partialorder %v159, 0.7853982
    %vm161 = vcmp.lt.s32.totalorder %v157, 0
    %v162 = vand.u32 %v157, 2139095040
    %v163 = vshrl.u32 %v162, 23
    %v164 = vsub.s32 %v163, 127
    %v165 = vand.u32 2147483647, %v157
    %v166 = vand.u32 %v165, 8388607
    %v167 = vor.u32 %v166, 8388608
    %v168 = vsub.s32 0, %v167
    %v169 = vadd.s32 %v164, 1
    %vm170 = vcmp.gt.s32.totalorder %v169, 0
    %v171 = vsel %vm170, %v169, 0
    %v172 = vshrl.u32 %v171, 5
    %v173 = vand.u32 %v171, 31
    %v174 = vsub.s32 32, %v173
    %v175 = vshrl.u32 683565275, %v174
    %v176 = vshll.u32 683565275, %v173
    %v177 = vshrl.u32 2475754826, %v174
    %v178 = vor.u32 %v176, %v177
    %v179 = vshll.u32 2475754826, %v173
    %v180 = vshrl.u32 2131351028, %v174
    %v181 = vor.u32 %v179, %v180
    %v182 = vshll.u32 2131351028, %v173
    %v183 = vshrl.u32 2102212464, %v174
    %v184 = vor.u32 %v182, %v183
    %v185 = vshll.u32 2102212464, %v173
    %v186 = vshrl.u32 920167782, %v174
    %v187 = vor.u32 %v185, %v186
    %v188 = vshll.u32 920167782, %v173
    %v189 = vshrl.u32 1326507024, %v174
    %v190 = vor.u32 %v188, %v189
    %vm191 = vcmp.lt.s32.totalorder %v172, 1
    %vm192 = vcmp.lt.s32.totalorder %v172, 2
    %vm193 = vcmp.lt.s32.totalorder %v172, 3
    %vm194 = vcmp.lt.s32.totalorder %v172, 4
    %v195 = vsel %vm191, %v175, %v178
    %v196 = vsel %vm194, %v184, 2102212464
    %v197 = vsel %vm193, %v181, %v196
    %v198 = vsel %vm192, %v195, %v197
    %v199 = vsel %vm191, %v178, %v181
    %v200 = vsel %vm194, %v187, 920167782
    %v201 = vsel %vm193, %v184, %v200
    %v202 = vsel %vm192, %v199, %v201
    %v203 = vsel %vm191, %v181, %v184
    %v204 = vsel %vm194, %v190, 1326507024
    %v205 = vsel %vm193, %v187, %v204
    %v206 = vsel %vm192, %v203, %v205
    %v207 = vshll.u32 %v167, 8
    %v208 = vmul.u32.u64.compose %v207, %v206
    %v209 = vextract.low.u32 %v208
    %v210 = vextract.high.u32 %v208
    %v211 = vmul.u32.u64.compose %v207, %v202
    %v212 = vextract.low.u32 %v211
    %v213 = vextract.high.u32 %v211
    %v214 = vmul.u32 %v207, %v198
    %v215 = vadd.s32 %v210, %v212
    %vm216 = vc.u32 %v210, %v212
    %v217 = vadd.s32 %v213, 1
    %v218 = vsel %vm216, %v217, %v213
    %v219 = vadd.s32 %v214, %v218
    %v220 = vadd.s32 %v219, 536870912
    %v221 = vshrl.u32 %v220, 30
    %v222 = vshll.u32 %v221, 30
    %v223 = vsub.s32 %v219, %v222
    %vm224 = vcmp.lt.s32.totalorder %v223, 0
    %v225 = vsub.s32 0, %v223
    %v226 = vsel %vm224, %v225, %v223
    %v227 = vclz %v226
    %v228 = vsub.s32 %v227, 2
    %vm229 = vcmp.gt.s32.totalorder 0, %v228
    %v230 = vsel %vm229, 0, %v228
    %v231 = vsub.s32 32, %v230
    %v232 = vshll.u32 %v223, %v230
    %v233 = vshrl.u32 %v215, %v231
    %v234 = vor.u32 %v232, %v233
    %v235 = vsub.s32 4294967266, %v230
    %v236 = vadd.s32 %v235, 127
    %v237 = vshll.u32 %v236, 23
    %v238 = vor.u32 4788187, %v237
    %v239 = vand.u32 2147483647, %v238
    %v241 = vcvt.s32.f32 %v234
    %v242 = vmul.f32 %v241, %v239
    %v243 = vxor.u32 %v242, 2147483648
    %v244 = vsel %vm161, %v243, %v242
    %v245 = vsub.s32 4, %v221
    %v246 = vsel %vm161, %v245, %v221
    %v247 = vsel %vm160, %v157, %v244
    %v248 = vsel %vm160, 0, %v246
    %v249 = vcosq.f32.pop %v247
    %v250 = vsinq.f32.pop %v247
    %vm251 = vweird.f32 %v157
    %v252 = vadd.s32 %v248, 3
    %v253 = vand.u32 %v252, 3
    %vm254 = vcmp.lt.s32.totalorder %v253, 2
    %vm255 = vcmp.eq.s32.totalorder %v253, 0
    %v256 = vxor.u32 %v250, 2147483648
    %v257 = vsel %vm255, %v249, %v256
    %vm258 = vcmp.eq.s32.totalorder %v253, 2
    %v259 = vxor.u32 %v249, 2147483648
    %v260 = vsel %vm258, %v259, %v250
    %v261 = vsel %vm254, %v257, %v260
    %v262 = vsel %vm251, nan, %v261
    %v263 = vld [vmem:[#allocation7] sm:$0xff]
    %v264 = vld [vmem:[#allocation7 + $0x8] sm:$0xff]
    %v265 = vld [vmem:[#allocation7 + $0x10] sm:$0xff]
    %v266 = vld [vmem:[#allocation7 + $0x18] sm:$0xff]
    %v267 = vld [vmem:[#allocation7 + $0x20] sm:$0xff]
    %v268 = vld [vmem:[#allocation7 + $0x28] sm:$0xff]
    %v269 = vld [vmem:[#allocation7 + $0x30] sm:$0xff]
    %v270 = vld [vmem:[#allocation7 + $0x38] sm:$0xff]
    %v271 = vld [vmem:[#allocation7 + $0x40] sm:$0xff]
    %v272 = vld [vmem:[#allocation7 + $0x48] sm:$0xff]
    %v273 = vld [vmem:[#allocation7 + $0x50] sm:$0xff]
    %v274 = vld [vmem:[#allocation7 + $0x58] sm:$0xff]
    %v275 = vld [vmem:[#allocation7 + $0x60] sm:$0xff]
    %v276 = vld [vmem:[#allocation7 + $0x68] sm:$0xff]
    %v277 = vld [vmem:[#allocation7 + $0x70] sm:$0xff]
    %v278 = vld [vmem:[#allocation7 + $0x78] sm:$0xff]
    %279 = vmatprep.subr.mxu0 0.0
    %280 = vmatpush1.msra.mxu0 %v263
    %281 = vmatprep.subr.mxu0 0.0
    %282 = vmatpush1.msra.mxu0 %v264
    %283 = vmatprep.subr.mxu0 0.0
    %284 = vmatpush1.msra.mxu0 %v265
    %285 = vmatprep.subr.mxu0 0.0
    %286 = vmatpush1.msra.mxu0 %v266
    %287 = vmatprep.subr.mxu0 0.0
    %288 = vmatpush1.msra.mxu0 %v267
    %289 = vmatprep.subr.mxu0 0.0
    %290 = vmatpush1.msra.mxu0 %v268
    %291 = vmatprep.subr.mxu0 0.0
    %292 = vmatpush1.msra.mxu0 %v269
    %293 = vmatprep.subr.mxu0 0.0
    %294 = vmatpush1.msra.mxu0 %v270
    %295 = vmatprep.subr.mxu0 0.0
    %296 = vmatpush1.msra.mxu0 %v271
    %297 = vmatprep.subr.mxu0 0.0
    %298 = vmatpush1.msra.mxu0 %v272
    %299 = vmatprep.subr.mxu0 0.0
    %300 = vmatpush1.msra.mxu0 %v273
    %301 = vmatprep.subr.mxu0 0.0
    %302 = vmatpush1.msra.mxu0 %v274
    %303 = vmatprep.subr.mxu0 0.0
    %304 = vmatpush1.msra.mxu0 %v275
    %305 = vmatprep.subr.mxu0 0.0
    %306 = vmatpush1.msra.mxu0 %v276
    %307 = vmatprep.subr.mxu0 0.0
    %308 = vmatpush1.msra.mxu0 %v277
    %309 = vmatprep.subr.mxu0 0.0
    %310 = vmatpush1.msra.mxu0 %v278
    %311 = vmatprep.subr.mxu0 0.0
    %312 = vmatpush1.msra.mxu0 0.0
    %313 = vmatprep.subr.mxu0 0.0
    %314 = vmatpush1.msra.mxu0 0.0
    %315 = vmatprep.subr.mxu0 0.0
    %316 = vmatpush1.msra.mxu0 0.0
    %317 = vmatprep.subr.mxu0 0.0
    %318 = vmatpush1.msra.mxu0 0.0
    %319 = vmatprep.subr.mxu0 0.0
    %320 = vmatpush1.msra.mxu0 0.0
    %321 = vmatprep.subr.mxu0 0.0
    %322 = vmatpush1.msra.mxu0 0.0
    %323 = vmatprep.subr.mxu0 0.0
    %324 = vmatpush1.msra.mxu0 0.0
    %325 = vmatprep.subr.mxu0 0.0
    %326 = vmatpush1.msra.mxu0 0.0
    %327 = vmatprep.subr.mxu0 0.0
    %328 = vmatpush1.msra.mxu0 0.0
    %329 = vmatprep.subr.mxu0 0.0
    %330 = vmatpush1.msra.mxu0 0.0
    %331 = vmatprep.subr.mxu0 0.0
    %332 = vmatpush1.msra.mxu0 0.0
    %333 = vmatprep.subr.mxu0 0.0
    %334 = vmatpush1.msra.mxu0 0.0
    %335 = vmatprep.subr.mxu0 0.0
    %336 = vmatpush1.msra.mxu0 0.0
    %337 = vmatprep.subr.mxu0 0.0
    %338 = vmatpush1.msra.mxu0 0.0
    %339 = vmatprep.subr.mxu0 0.0
    %340 = vmatpush1.msra.mxu0 0.0
    %341 = vmatprep.subr.mxu0 0.0
    %342 = vmatpush1.msra.mxu0 0.0
    %343 = vmatprep.mubr.f32.mxu0 0.0
    %344 = vmatmul.mubr.f32.gmra.mrb[0].mxu0 %v262
    %v345 = vpop.f32.mrb[0].mxu0
    %v346 = vadd.f32 0.0, %v345
    %v347 = vpop.f32.mrb[0].mxu0
    %348 = vdwg.mxu0
    %v349 = vadd.f32 %v155, %v346
    %350 = vadd.xlane.f32.xlu0 %v349
    %v351 = vpop.xlane.xlu0 %350
    %v352 = vmul.f32 %v351, 0.03125
    %v353 = vmul.f32 %v349, %v349
    %354 = vadd.xlane.f32.xlu0 %v353
    %v355 = vpop.xlane.xlu0 %354
    %v356 = vmul.f32 %v355, 0.03125
    %v357 = vmul.f32 %v352, %v352
    %v358 = vsub.f32 %v356, %v357
    %v359 = vsub.f32 %v349, %v352
    %v360 = vadd.f32 %v358, 1e-05
    %v361 = vrsqrt.pop %v360
    %v362 = vmul.f32 %v359, %v361
    %v363 = vld [vmem:[%s4] sm:$0x1]
    %v365 = vlaneseq
    %v366 = vshrl.u32 %v365, 7
    %v367 = vsub.s32 0, %v366
    %v368 = vrot.slane %v363, %v367
    %v370 = vmul.f32 %v362, %v368
    %v371 = vld [vmem:[%s5] sm:$0x1]
    %v373 = vlaneseq
    %v374 = vshrl.u32 %v373, 7
    %v375 = vsub.s32 0, %v374
    %v376 = vrot.slane %v371, %v375
    %v378 = vadd.f32 %v370, %v376
    %379 = vst [vmem:[#allocation8] sm:$0xff] %v378
    // Predicated region
    $region38: #{tpu_custom_call.1} parent=1 // pred_check
      _
    $region39: #{tpu_custom_call.1} parent=1 // pred_check_branch
      %381 = sbr.rel (0) target = $region41
    $region40: #{tpu_custom_call.1} parent=1 // pred_region
      %s383 = ssub.s32 128, 128
      %384 = vsyncadd [#allocation4], %s383
      %s386 = sshll.u32 [#allocation8], 4
      %s387 = int_to_ptr.vmem [resolvable:$true] %s386
      %389 = dma.vmem_to_hbm [thread:$0]  %s387, 128, %s6, [#allocation4]
    $region41: #{tpu_custom_call.1} parent=1 // pred_fallthru
      _
    // Predicated region
    $region42: #{tpu_custom_call.1} parent=1 // pred_check
      _
    $region43: #{tpu_custom_call.1} parent=1 // pred_check_branch
      %391 = sbr.rel (0) target = $region45
    $region44: #{tpu_custom_call.1} parent=1 // pred_region
      %392 = dma.done [#allocation4], 128
    $region45: #{tpu_custom_call.1} parent=1 // pred_fallthru
      _
    %393 = vsyncpa [#allocation3], 1
    %394 = vsyncpa [#allocation6], 1
    %395 = vsyncpa [#allocation4], 1

</llo_original>
